<compile_context>
chip_gen: v7x
topology: tpu7x:2x2x1
jax: 0.10.0
libtpu: 0.0.40
codegen_flags: <defaults>
</compile_context>

<pallas_src>
import jax
import jax.numpy as jnp
from jax import lax
from jax.experimental import pallas as pl
from jax.experimental.pallas import tpu as pltpu


# -----------------------------------------------------------------------------
# Pallas kernel: one MXU matmul per (row-tile, lane-tile) grid point.
# -----------------------------------------------------------------------------
def _transform_kernel(m_ref, src_ref, out_ref):
    # m_ref   : (TR, 8)  VMEM - per-frame/coordinate rows [r_i0, r_i1, t_i, 0...]
    # src_ref : (8, TL)  VMEM - homogeneous source slab [x; y; w; zeros]
    # out_ref : (TR, TL) VMEM - transformed coordinates (sublane/lane dense)
    out_ref[...] = jnp.dot(
        m_ref[...], src_ref[...],
        precision=lax.Precision.HIGHEST,          # f32 result good to ~1e-6
        preferred_element_type=jnp.float32)


# -----------------------------------------------------------------------------
# Geometry packing (done once at construction) + kernel wrapper.
# -----------------------------------------------------------------------------
def _build_src_km(points, view_directions):
    """Build the (8, L) channel-major homogeneous source slab.

    Lanes [0:HW]    -> sample points   (w = 1 -> translation applied)
    Lanes [HW:HW+H] -> view directions (w = 0 -> rotation only)
    Lanes [HW+H:L]  -> zero padding up to a multiple of 128 lanes
    Rows: x, y, w, then 5 zero rows (pads the matmul K dim to 8).
    """
    H, W, _ = points.shape
    HW = H * W
    f32 = jnp.float32
    pts = points.reshape(HW, 2).astype(f32)             # (HW, 2)
    vd = view_directions.astype(f32)                    # (H, 2)
    xs = jnp.concatenate([pts[:, 0], vd[:, 0]])         # (HW+H,)
    ys = jnp.concatenate([pts[:, 1], vd[:, 1]])
    ws = jnp.concatenate([jnp.ones((HW,), f32), jnp.zeros((H,), f32)])
    L = max(128, ((HW + H + 127) // 128) * 128)
    src = jnp.stack([xs, ys, ws], axis=0)                # (3, HW+H)
    src = jnp.pad(src, ((0, 8 - 3), (0, L - (HW + H))))  # (8, L)
    return src, H, W, L


def _run_transform(src_km, L, H, W, positions, orientations,
                   *, lane_tile=2048, row_tile=256):
    """Run the Pallas kernel and unpack to the module's output layout."""
    N = positions.shape[0]
    HW = H * W
    f32 = jnp.float32

    # Matmul LHS: row (3n+i) = [R[n,i,0], R[n,i,1], t[n,i], 0,0,0,0,0]
    R = orientations.astype(f32)                                   # (N, 3, 3)
    t = positions.astype(f32)                                      # (N, 3)
    M = jnp.concatenate([R[:, :, 0:2], t[:, :, None]], axis=-1)    # (N, 3, 3)
    rows = 3 * N
    rows_pad = max(8, ((rows + 7) // 8) * 8)
    M = jnp.pad(M.reshape(rows, 3), ((0, rows_pad - rows), (0, 5)))  # (rows_pad, 8)

    TR = rows_pad if rows_pad <= row_tile else row_tile
    TL = L if L <= lane_tile else lane_tile
    grid = (pl.cdiv(rows_pad, TR), pl.cdiv(L, TL))

    out = pl.pallas_call(
        _transform_kernel,
        out_shape=jax.ShapeDtypeStruct((rows_pad, L), f32),
        grid_spec=pltpu.PrefetchScalarGridSpec(
            num_scalar_prefetch=0,
            grid=grid,
            in_specs=[
                pl.BlockSpec((TR, 8), lambda i, j: (i, 0)),   # M rows
                pl.BlockSpec((8, TL), lambda i, j: (0, j)),   # src lanes
            ],
            out_specs=pl.BlockSpec((TR, TL), lambda i, j: (i, j)),
        ),
        compiler_params=pltpu.CompilerParams(
            dimension_semantics=("parallel", "parallel"),
            vmem_limit_bytes=64 << 20),
    )(M, src_km)

    # Unpack back to the PyTorch module's interface.
    # TODO(synk): the external `volume` contract is point-major (N, H, W, 3),
    # so this channel-major -> point-major transpose stays in the XLA wrapper;
    # fusing it away would require changing the external volume interface.
    out = out[:rows, :].reshape(N, 3, L)
    points_global = jnp.transpose(out[:, :, :HW], (0, 2, 1)).reshape(N, H, W, 3)
    vd_global = jnp.transpose(out[:, :, HW:HW + H], (0, 2, 1))     # (N, H, 3)
    return {'points': points_global, 'view_directions': vd_global}


def convert_transducer_to_global_coordinates_pallas(points_norm, positions,
                                                    orientations,
                                                    view_directions):
    """Standalone Pallas equivalent of convert_transducer_to_global_coordinates."""
    src_km, H, W, L = _build_src_km(points_norm, view_directions)
    return _run_transform(src_km, L, H, W, positions, orientations)


# -----------------------------------------------------------------------------
# Renderer ('baseline') — dict pass-through, identical to _render_baseline.
# -----------------------------------------------------------------------------
def _render_baseline(planes, **kwargs):
    return {'planes_rendered': planes['positional'],
            'planes_clean': planes['positional'],
            'planes_raw': planes['positional']}


# -----------------------------------------------------------------------------
# Transducer module (JAX / Pallas version).
# -----------------------------------------------------------------------------
class TransducerPallas:
    def __init__(self, fov=0.2, min_depth=0.03, max_depth=0.2,
                 num_rays=8, num_ray_points=16, frequency=5,
                 resolution=1, tgc_factor=1, **kwargs):
        self.fov = fov
        self.num_ray_points = num_ray_points
        self.num_rays = num_rays
        self.max_depth = max_depth
        self.min_depth = min_depth
        self.frequency = frequency
        self.resolution = resolution
        self.tgc_factor = tgc_factor
        self.subsample_factor = None
        self.volume_postprocessor = None
        self.renderer_postprocessor = None
        self.renderer = _render_baseline

        # Deterministic construction of the sample grid and FOV vectors
        # (shapes (H, W, 2) and (H, 2), matching the PyTorch module attrs).
        theta = jnp.linspace(-fov / 2.0, fov / 2.0, num_rays)            # (H,)
        depth = jnp.linspace(min_depth, max_depth, num_ray_points)       # (W,)
        dir2 = jnp.stack([jnp.sin(theta), jnp.cos(theta)], axis=-1)      # (H, 2)
        self.fov_vectors = dir2.astype(jnp.float32)                      # (H, 2)
        self.sample_points = (depth[None, :, None] *
                              dir2[:, None, :]).astype(jnp.float32)      # (H, W, 2)
        self.sample_points_norm = self.sample_points / max_depth
        self.fov_mask = jnp.ones((num_rays, num_ray_points), jnp.float32)

        # Precompute the packed source slab ONCE (geometry is fixed).
        # NOTE: like the original PyTorch module, the *un-normalized*
        # sample_points are what get transformed and fed to `volume`.
        self._src_cache = {}
        self._src_cache[None] = _build_src_km(self.sample_points,
                                              self.fov_vectors)

    def _get_src(self, sf):
        # Cache the packed slab per subsample factor (avoids silent host-side
        # rebuild/re-trace on every call).
        if sf not in self._src_cache:
            self._src_cache[sf] = _build_src_km(self.sample_points[::sf, ::sf],
                                                self.fov_vectors[::sf])
        return self._src_cache[sf]

    def get_transducer_sample_points_global(self, positions, orientations):
        src_km, H, W, L = self._get_src(self.subsample_factor)
        return _run_transform(src_km, L, H, W, positions, orientations)

    def forward(self, volume, positions, orientations, time=None, **kwargs):
        query_points = self.get_transducer_sample_points_global(
            positions=positions, orientations=orientations)
        volume_out = volume(x=query_points['points'], time=time,
                            view_directions=query_points['view_directions'])
        if self.volume_postprocessor is not None:
            volume_out = self.volume_postprocessor(volume_out, **kwargs)
        renderer_out = self.renderer(
            volume_out,
            max_depth=self.max_depth - self.min_depth,
            resolution=self.subsample_factor)
        if self.renderer_postprocessor is not None:
            renderer_out = self.renderer_postprocessor(renderer_out, **kwargs)
        return renderer_out

    __call__ = forward


# -----------------------------------------------------------------------------
# Synthetic deterministic "volume": (N,H,W,3) points -> {'positional': (N,2,H,W)}
# TODO(synk): `volume` is an external callable argument of forward (not part of
#             the module); implemented here in plain JAX as a simple analytic field.
# -----------------------------------------------------------------------------
def volume_fn(x, time, view_directions):
    s = jnp.sum(x, axis=-1)                                           # (N, H, W)
    planes = jnp.stack([jnp.sin(8.0 * s), jnp.cos(8.0 * s)], axis=1)  # (N,2,H,W)
    if time is not None:
        planes = planes + time[:, None, None, None]
    return {'positional': planes}


# -----------------------------------------------------------------------------
# Pure-JAX reference for the coordinate transform (correctness check).
# -----------------------------------------------------------------------------
def _ref_convert(points_norm, positions, orientations, view_directions):
    H, W, _ = points_norm.shape
    ps = jnp.concatenate([points_norm, jnp.zeros((H, W, 1), points_norm.dtype)],
                         axis=-1).reshape(-1, 3)                         # (HW, 3)
    pts = jnp.einsum('nij,kj->nki', orientations, ps) + positions[:, None, :]
    pts = pts.reshape(positions.shape[0], H, W, 3)
    vd = jnp.concatenate([view_directions,
                          jnp.zeros((H, 1), view_directions.dtype)], axis=-1)
    vdr = jnp.einsum('nij,hj->nhi', orientations, vd)
    return pts, vdr


if __name__ == "__main__":
    key = jax.random.PRNGKey(0)
    k1, k2, k3 = jax.random.split(key, 3)

    N = 2
    num_rays, num_ray_points = 8, 16

    positions = jax.random.normal(k1, (N, 3), dtype=jnp.float32) * 0.1
    # Deterministic proper rotation matrices via QR of a random matrix.
    A = jax.random.normal(k2, (N, 3, 3), dtype=jnp.float32)
    Q, R = jnp.linalg.qr(A)
    orientations = Q * jnp.sign(jnp.diagonal(R, axis1=-2, axis2=-1))[:, None, :]
    time = jax.random.uniform(k3, (N,), dtype=jnp.float32)

    transducer = TransducerPallas(num_rays=num_rays,
                                  num_ray_points=num_ray_points)

    # Check the Pallas coordinate transform against a pure-JAX reference.
    qp = transducer.get_transducer_sample_points_global(positions, orientations)
    ref_pts, ref_vd = _ref_convert(transducer.sample_points, positions,
                                   orientations, transducer.fov_vectors)
    assert qp['points'].shape == (N, num_rays, num_ray_points, 3)
    assert qp['view_directions'].shape == (N, num_rays, 3)
    assert jnp.allclose(qp['points'], ref_pts, atol=1e-5, rtol=1e-5)
    assert jnp.allclose(qp['view_directions'], ref_vd, atol=1e-5, rtol=1e-5)

    # Also exercise the standalone converter (rebuild path).
    qp2 = convert_transducer_to_global_coordinates_pallas(
        transducer.sample_points, positions, orientations,
        transducer.fov_vectors)
    assert jnp.allclose(qp2['points'], ref_pts, atol=1e-5, rtol=1e-5)
    assert jnp.allclose(qp2['view_directions'], ref_vd, atol=1e-5, rtol=1e-5)

    # Full forward pass.
    out = transducer(volume=volume_fn, positions=positions,
                     orientations=orientations, time=time)
    jax.block_until_ready(out['planes_rendered'])
    assert out['planes_rendered'].shape == (N, 2, num_rays, num_ray_points)

    print("KERNEL_OK")
</pallas_src>

<mosaic_0001>
module attributes {stable_mosaic.version = 11 : i64} {
  func.func @_transform_kernel(%arg0: i32, %arg1: i32, %arg2: memref<8x8xf32, #tpu.memory_space<vmem>>, %arg3: memref<8x256xf32, #tpu.memory_space<vmem>>, %arg4: memref<8x256xf32, #tpu.memory_space<vmem>>) attributes {dimension_semantics = [#tpu.dimension_semantics<parallel>, #tpu.dimension_semantics<parallel>], iteration_bounds = array<i64: 1, 1>, scalar_prefetch = 0 : i64, scratch_operands = 0 : i64, tpu.core_type = #tpu.core_type<tc>, window_params = [{transform_indices = @transform_0, window_bounds = array<i64: 8, 8>}, {transform_indices = @transform_1, window_bounds = array<i64: 8, 256>}, {transform_indices = @transform_2, window_bounds = array<i64: 8, 256>}]} {
    %c0 = arith.constant 0 : index
    %c0_0 = arith.constant 0 : index
    %0 = vector.load %arg2[%c0, %c0_0] : memref<8x8xf32, #tpu.memory_space<vmem>>, vector<8x8xf32>
    %c0_1 = arith.constant 0 : index
    %c0_2 = arith.constant 0 : index
    %1 = vector.load %arg3[%c0_1, %c0_2] : memref<8x256xf32, #tpu.memory_space<vmem>>, vector<8x256xf32>
    %cst = arith.constant dense<0.000000e+00> : vector<8x256xf32>
    %2 = tpu.matmul %0, %1, %cst {dimension_numbers = #tpu.dot_dimension_numbers<[1], [0], [0], [1], [0, 0, 1, 1], [], []>, precision = #tpu.contract_precision<fp32>} : vector<8x8xf32>, vector<8x256xf32>, vector<8x256xf32> -> vector<8x256xf32>
    %c0_3 = arith.constant 0 : index
    %c0_4 = arith.constant 0 : index
    %3 = vector.load %arg4[%c0_3, %c0_4] : memref<8x256xf32, #tpu.memory_space<vmem>>, vector<8x256xf32>
    tpu.vector_store %arg4[%c0_3, %c0_4], %2 {strides = array<i32>} : memref<8x256xf32, #tpu.memory_space<vmem>>, vector<8x256xf32>,
    return
  }
  func.func @transform_0(%arg0: i32, %arg1: i32) -> (i32, i32) {
    %c0_i32 = arith.constant 0 : i32
    %c0_i32_0 = arith.constant 0 : i32
    return %arg0, %c0_i32 : i32, i32
  }
  func.func @transform_1(%arg0: i32, %arg1: i32) -> (i32, i32) {
    %c0_i32 = arith.constant 0 : i32
    %c0_i32_0 = arith.constant 0 : i32
    return %c0_i32, %arg1 : i32, i32
  }
  func.func @transform_2(%arg0: i32, %arg1: i32) -> (i32, i32) {
    %c0_i32 = arith.constant 0 : i32
    return %arg0, %arg1 : i32, i32
  }
}

</mosaic_0001>

<llo_original>
// kernel: tpu_custom_call.1
$region0: #{tpu_custom_call.1}
  #allocation0 [shape = 'u32[]', space=smem, size = 0x4, offset = 0x4, fixed_abs, tag = 'smem constant byte address 0x4 - core index']
  #allocation1 [shape = 'u32[144,128]{1,0:T(1,128)}', space=vmem, size = 0x12000, scoped, tag = 'internal scratch']
  %s0 = inlined_call_operand.hbm [shape: f32[8,8], index: 0, kind: input, shape index: {}]
  %s1 = inlined_call_operand.hbm [shape: f32[8,256], index: 1, kind: input, shape index: {}]
  %s2 = inlined_call_operand.hbm [shape: f32[8,256], index: 2, kind: output, shape index: {}]
  %s3 = sld [smem:[#allocation0]]
  $region26: #{tpu_custom_call.1} parent=0
    _
  %s5 = ssub.s32 1, %s3
  %s6 = scalar_select 0, %s5, %s3
  $region1: #{tpu_custom_call.1} parent=0
    #allocation2 [shape = 'u8[4096]{0}', space=vmem, size = 0x1000, scoped, tag = 'input window, operand 0, single buffered']
    #allocation3 [shape = 's32[1]{0}', space=sflag, size = 0x4, scoped, tag = 'scoped memory for tpu_custom_call.1']
    #allocation4 [shape = 's32[1]{0}', space=sflag, size = 0x4, scoped, tag = 'scoped memory for tpu_custom_call.1']
    #allocation5 [shape = 'u8[8192]{0}', space=vmem, size = 0x2000, scoped, tag = 'input window, operand 1, single buffered']
    #allocation6 [shape = 's32[1]{0}', space=sflag, size = 0x4, scoped, tag = 'scoped memory for tpu_custom_call.1']
    #allocation7 [shape = 'u8[8192]{0}', space=vmem, size = 0x2000, scoped, tag = 'output window, operand 0, single buffered']
    %7 = vsyncpa [#allocation3], 0
    %8 = vsyncpa [#allocation6], 0
    %9 = vsyncpa [#allocation4], 0
    // Predicated region
    $region2: #{tpu_custom_call.1} parent=1 // pred_check
      _
    $region3: #{tpu_custom_call.1} parent=1 // pred_check_branch
      %11 = sbr.rel (0) target = $region5
    $region4: #{tpu_custom_call.1} parent=1 // pred_region
      %s13 = ssub.s32 128, 128
      %14 = vsyncadd [#allocation3], %s13
      %s16 = sshll.u32 [#allocation2], 4
      %s17 = int_to_ptr.vmem [resolvable:$true] %s16
      %19 = dma.hbm_to_vmem [thread:$0]  %s0, 128, %s17, [#allocation3]
    $region5: #{tpu_custom_call.1} parent=1 // pred_fallthru
      _
    // Predicated region
    $region6: #{tpu_custom_call.1} parent=1 // pred_check
      _
    $region7: #{tpu_custom_call.1} parent=1 // pred_check_branch
      %21 = sbr.rel (0) target = $region9
    $region8: #{tpu_custom_call.1} parent=1 // pred_region
      %s23 = ssub.s32 256, 256
      %24 = vsyncadd [#allocation6], %s23
      %s26 = sshll.u32 [#allocation5], 4
      %s27 = int_to_ptr.vmem [resolvable:$true] %s26
      %29 = dma.hbm_to_vmem [thread:$0]  %s1, 256, %s27, [#allocation6]
    $region9: #{tpu_custom_call.1} parent=1 // pred_fallthru
      _
    // Predicated region
    $region10: #{tpu_custom_call.1} parent=1 // pred_check
      _
    $region11: #{tpu_custom_call.1} parent=1 // pred_check_branch
      %31 = sbr.rel (0) target = $region13
    $region12: #{tpu_custom_call.1} parent=1 // pred_region
      %32 = dma.done [#allocation3], 128
    $region13: #{tpu_custom_call.1} parent=1 // pred_fallthru
      _
    // Predicated region
    $region14: #{tpu_custom_call.1} parent=1 // pred_check
      _
    $region15: #{tpu_custom_call.1} parent=1 // pred_check_branch
      %34 = sbr.rel (0) target = $region17
    $region16: #{tpu_custom_call.1} parent=1 // pred_region
      %35 = dma.done [#allocation6], 256
    $region17: #{tpu_custom_call.1} parent=1 // pred_fallthru
      _
    %v36 = vld [vmem:[#allocation2] sm:$0xff]
    %v37 = vld [vmem:[#allocation5] sm:$0xff]
    %v38 = vld [vmem:[#allocation5 + $0x8] sm:$0xff]
    %vm39 = vcmask 64512
    %v41 = vsel %vm39, %v36, 0
    %v43 = vand.u32 %v38, 4294901760
    %44 = vmatprep.subr.mxu0 %v43
    %v45 = vand.u32 %v37, 4294901760
    %46 = vmatpush1.msra.mxu0 %v45
    %47 = vmatprep.subr.mxu0 0.0
    %48 = vmatpush1.msra.mxu0 0.0
    %49 = vmatprep.subr.mxu0 0.0
    %50 = vmatpush1.msra.mxu0 0.0
    %51 = vmatprep.subr.mxu0 0.0
    %52 = vmatpush1.msra.mxu0 0.0
    %53 = vmatprep.subr.mxu0 0.0
    %54 = vmatpush1.msra.mxu0 0.0
    %55 = vmatprep.subr.mxu0 0.0
    %56 = vmatpush1.msra.mxu0 0.0
    %57 = vmatprep.subr.mxu0 0.0
    %58 = vmatpush1.msra.mxu0 0.0
    %59 = vmatprep.subr.mxu0 0.0
    %60 = vmatpush1.msra.mxu0 0.0
    %61 = vmatprep.subr.mxu0 0.0
    %62 = vmatpush1.msra.mxu0 0.0
    %63 = vmatprep.subr.mxu0 0.0
    %64 = vmatpush1.msra.mxu0 0.0
    %65 = vmatprep.subr.mxu0 0.0
    %66 = vmatpush1.msra.mxu0 0.0
    %67 = vmatprep.subr.mxu0 0.0
    %68 = vmatpush1.msra.mxu0 0.0
    %69 = vmatprep.subr.mxu0 0.0
    %70 = vmatpush1.msra.mxu0 0.0
    %71 = vmatprep.subr.mxu0 0.0
    %72 = vmatpush1.msra.mxu0 0.0
    %73 = vmatprep.subr.mxu0 0.0
    %74 = vmatpush1.msra.mxu0 0.0
    %75 = vmatprep.subr.mxu0 0.0
    %76 = vmatpush1.msra.mxu0 0.0
    %77 = vmatprep.subr.mxu0 0.0
    %78 = vmatpush1.msra.mxu0 0.0
    %79 = vmatprep.subr.mxu0 0.0
    %80 = vmatpush1.msra.mxu0 0.0
    %81 = vmatprep.subr.mxu0 0.0
    %82 = vmatpush1.msra.mxu0 0.0
    %83 = vmatprep.subr.mxu0 0.0
    %84 = vmatpush1.msra.mxu0 0.0
    %85 = vmatprep.subr.mxu0 0.0
    %86 = vmatpush1.msra.mxu0 0.0
    %87 = vmatprep.subr.mxu0 0.0
    %88 = vmatpush1.msra.mxu0 0.0
    %89 = vmatprep.subr.mxu0 0.0
    %90 = vmatpush1.msra.mxu0 0.0
    %91 = vmatprep.subr.mxu0 0.0
    %92 = vmatpush1.msra.mxu0 0.0
    %93 = vmatprep.subr.mxu0 0.0
    %94 = vmatpush1.msra.mxu0 0.0
    %95 = vmatprep.subr.mxu0 0.0
    %96 = vmatpush1.msra.mxu0 0.0
    %97 = vmatprep.subr.mxu0 0.0
    %98 = vmatpush1.msra.mxu0 0.0
    %99 = vmatprep.subr.mxu0 0.0
    %100 = vmatpush1.msra.mxu0 0.0
    %101 = vmatprep.subr.mxu0 0.0
    %102 = vmatpush1.msra.mxu0 0.0
    %103 = vmatprep.subr.mxu0 0.0
    %104 = vmatpush1.msra.mxu0 0.0
    %105 = vmatprep.subr.mxu0 0.0
    %106 = vmatpush1.msra.mxu0 0.0
    %107 = vmatprep.subr.mxu0 0.0
    %108 = vmatpush1.msra.mxu0 0.0
    %109 = vmatprep.mubr.f32.mxu0 0.0
    %v110 = vand.u32 %v41, 4294901760
    %v111 = vsub.f32 %v41, %v110
    %v112 = vand.u32 %v111, 4294901760
    %v113 = vsub.f32 %v111, %v112
    %v114 = vand.u32 %v113, 4294901760
    %115 = vmatmul.mubr.f32.gmra.mrb[0].mxu0 %v114
    %v116 = vpop.f32.mrb[0].mxu0
    %v117 = vadd.f32 0.0, %v116
    %v118 = vpop.f32.mrb[0].mxu0
    %v119 = vadd.f32 0.0, %v118
    %120 = vdwg.mxu0
    %v121 = vand.u32 %v38, 4294901760
    %v122 = vsub.f32 %v38, %v121
    %v123 = vand.u32 %v122, 4294901760
    %v124 = vsub.f32 %v122, %v123
    %v125 = vand.u32 %v124, 4294901760
    %126 = vmatprep.subr.mxu0 %v125
    %v127 = vand.u32 %v37, 4294901760
    %v128 = vsub.f32 %v37, %v127
    %v129 = vand.u32 %v128, 4294901760
    %v130 = vsub.f32 %v128, %v129
    %v131 = vand.u32 %v130, 4294901760
    %132 = vmatpush1.msra.mxu0 %v131
    %133 = vmatprep.subr.mxu0 0.0
    %134 = vmatpush1.msra.mxu0 0.0
    %135 = vmatprep.subr.mxu0 0.0
    %136 = vmatpush1.msra.mxu0 0.0
    %137 = vmatprep.subr.mxu0 0.0
    %138 = vmatpush1.msra.mxu0 0.0
    %139 = vmatprep.subr.mxu0 0.0
    %140 = vmatpush1.msra.mxu0 0.0
    %141 = vmatprep.subr.mxu0 0.0
    %142 = vmatpush1.msra.mxu0 0.0
    %143 = vmatprep.subr.mxu0 0.0
    %144 = vmatpush1.msra.mxu0 0.0
    %145 = vmatprep.subr.mxu0 0.0
    %146 = vmatpush1.msra.mxu0 0.0
    %147 = vmatprep.subr.mxu0 0.0
    %148 = vmatpush1.msra.mxu0 0.0
    %149 = vmatprep.subr.mxu0 0.0
    %150 = vmatpush1.msra.mxu0 0.0
    %151 = vmatprep.subr.mxu0 0.0
    %152 = vmatpush1.msra.mxu0 0.0
    %153 = vmatprep.subr.mxu0 0.0
    %154 = vmatpush1.msra.mxu0 0.0
    %155 = vmatprep.subr.mxu0 0.0
    %156 = vmatpush1.msra.mxu0 0.0
    %157 = vmatprep.subr.mxu0 0.0
    %158 = vmatpush1.msra.mxu0 0.0
    %159 = vmatprep.subr.mxu0 0.0
    %160 = vmatpush1.msra.mxu0 0.0
    %161 = vmatprep.subr.mxu0 0.0
    %162 = vmatpush1.msra.mxu0 0.0
    %163 = vmatprep.subr.mxu0 0.0
    %164 = vmatpush1.msra.mxu0 0.0
    %165 = vmatprep.subr.mxu0 0.0
    %166 = vmatpush1.msra.mxu0 0.0
    %167 = vmatprep.subr.mxu0 0.0
    %168 = vmatpush1.msra.mxu0 0.0
    %169 = vmatprep.subr.mxu0 0.0
    %170 = vmatpush1.msra.mxu0 0.0
    %171 = vmatprep.subr.mxu0 0.0
    %172 = vmatpush1.msra.mxu0 0.0
    %173 = vmatprep.subr.mxu0 0.0
    %174 = vmatpush1.msra.mxu0 0.0
    %175 = vmatprep.subr.mxu0 0.0
    %176 = vmatpush1.msra.mxu0 0.0
    %177 = vmatprep.subr.mxu0 0.0
    %178 = vmatpush1.msra.mxu0 0.0
    %179 = vmatprep.subr.mxu0 0.0
    %180 = vmatpush1.msra.mxu0 0.0
    %181 = vmatprep.subr.mxu0 0.0
    %182 = vmatpush1.msra.mxu0 0.0
    %183 = vmatprep.subr.mxu0 0.0
    %184 = vmatpush1.msra.mxu0 0.0
    %185 = vmatprep.subr.mxu0 0.0
    %186 = vmatpush1.msra.mxu0 0.0
    %187 = vmatprep.subr.mxu0 0.0
    %188 = vmatpush1.msra.mxu0 0.0
    %189 = vmatprep.subr.mxu0 0.0
    %190 = vmatpush1.msra.mxu0 0.0
    %191 = vmatprep.subr.mxu0 0.0
    %192 = vmatpush1.msra.mxu0 0.0
    %193 = vmatprep.subr.mxu0 0.0
    %194 = vmatpush1.msra.mxu0 0.0
    %195 = vmatprep.mubr.f32.mxu0 0.0
    %v196 = vand.u32 %v41, 4294901760
    %197 = vmatmul.mubr.f32.gmra.mrb[0].mxu0 %v196
    %v198 = vpop.f32.mrb[0].mxu0
    %v199 = vadd.f32 %v117, %v198
    %v200 = vpop.f32.mrb[0].mxu0
    %v201 = vadd.f32 %v119, %v200
    %202 = vdwg.mxu0
    %v203 = vand.u32 %v38, 4294901760
    %v204 = vsub.f32 %v38, %v203
    %205 = vmatprep.subr.mxu0 %v204
    %v206 = vand.u32 %v37, 4294901760
    %v207 = vsub.f32 %v37, %v206
    %208 = vmatpush1.msra.mxu0 %v207
    %209 = vmatprep.subr.mxu0 0.0
    %210 = vmatpush1.msra.mxu0 0.0
    %211 = vmatprep.subr.mxu0 0.0
    %212 = vmatpush1.msra.mxu0 0.0
    %213 = vmatprep.subr.mxu0 0.0
    %214 = vmatpush1.msra.mxu0 0.0
    %215 = vmatprep.subr.mxu0 0.0
    %216 = vmatpush1.msra.mxu0 0.0
    %217 = vmatprep.subr.mxu0 0.0
    %218 = vmatpush1.msra.mxu0 0.0
    %219 = vmatprep.subr.mxu0 0.0
    %220 = vmatpush1.msra.mxu0 0.0
    %221 = vmatprep.subr.mxu0 0.0
    %222 = vmatpush1.msra.mxu0 0.0
    %223 = vmatprep.subr.mxu0 0.0
    %224 = vmatpush1.msra.mxu0 0.0
    %225 = vmatprep.subr.mxu0 0.0
    %226 = vmatpush1.msra.mxu0 0.0
    %227 = vmatprep.subr.mxu0 0.0
    %228 = vmatpush1.msra.mxu0 0.0
    %229 = vmatprep.subr.mxu0 0.0
    %230 = vmatpush1.msra.mxu0 0.0
    %231 = vmatprep.subr.mxu0 0.0
    %232 = vmatpush1.msra.mxu0 0.0
    %233 = vmatprep.subr.mxu0 0.0
    %234 = vmatpush1.msra.mxu0 0.0
    %235 = vmatprep.subr.mxu0 0.0
    %236 = vmatpush1.msra.mxu0 0.0
    %237 = vmatprep.subr.mxu0 0.0
    %238 = vmatpush1.msra.mxu0 0.0
    %239 = vmatprep.subr.mxu0 0.0
    %240 = vmatpush1.msra.mxu0 0.0
    %241 = vmatprep.subr.mxu0 0.0
    %242 = vmatpush1.msra.mxu0 0.0
    %243 = vmatprep.subr.mxu0 0.0
    %244 = vmatpush1.msra.mxu0 0.0
    %245 = vmatprep.subr.mxu0 0.0
    %246 = vmatpush1.msra.mxu0 0.0
    %247 = vmatprep.subr.mxu0 0.0
    %248 = vmatpush1.msra.mxu0 0.0
    %249 = vmatprep.subr.mxu0 0.0
    %250 = vmatpush1.msra.mxu0 0.0
    %251 = vmatprep.subr.mxu0 0.0
    %252 = vmatpush1.msra.mxu0 0.0
    %253 = vmatprep.subr.mxu0 0.0
    %254 = vmatpush1.msra.mxu0 0.0
    %255 = vmatprep.subr.mxu0 0.0
    %256 = vmatpush1.msra.mxu0 0.0
    %257 = vmatprep.subr.mxu0 0.0
    %258 = vmatpush1.msra.mxu0 0.0
    %259 = vmatprep.subr.mxu0 0.0
    %260 = vmatpush1.msra.mxu0 0.0
    %261 = vmatprep.subr.mxu0 0.0
    %262 = vmatpush1.msra.mxu0 0.0
    %263 = vmatprep.subr.mxu0 0.0
    %264 = vmatpush1.msra.mxu0 0.0
    %265 = vmatprep.subr.mxu0 0.0
    %266 = vmatpush1.msra.mxu0 0.0
    %267 = vmatprep.subr.mxu0 0.0
    %268 = vmatpush1.msra.mxu0 0.0
    %269 = vmatprep.subr.mxu0 0.0
    %270 = vmatpush1.msra.mxu0 0.0
    %271 = vmatprep.mubr.f32.mxu0 0.0
    %v272 = vand.u32 %v41, 4294901760
    %v273 = vsub.f32 %v41, %v272
    %274 = vmatmul.mubr.f32.gmra.mrb[0].mxu0 %v273
    %v275 = vpop.f32.mrb[0].mxu0
    %v276 = vadd.f32 %v199, %v275
    %v277 = vpop.f32.mrb[0].mxu0
    %v278 = vadd.f32 %v201, %v277
    %279 = vdwg.mxu0
    %v280 = vand.u32 %v38, 4294901760
    %281 = vmatprep.subr.mxu0 %v280
    %v282 = vand.u32 %v37, 4294901760
    %283 = vmatpush1.msra.mxu0 %v282
    %284 = vmatprep.subr.mxu0 0.0
    %285 = vmatpush1.msra.mxu0 0.0
    %286 = vmatprep.subr.mxu0 0.0
    %287 = vmatpush1.msra.mxu0 0.0
    %288 = vmatprep.subr.mxu0 0.0
    %289 = vmatpush1.msra.mxu0 0.0
    %290 = vmatprep.subr.mxu0 0.0
    %291 = vmatpush1.msra.mxu0 0.0
    %292 = vmatprep.subr.mxu0 0.0
    %293 = vmatpush1.msra.mxu0 0.0
    %294 = vmatprep.subr.mxu0 0.0
    %295 = vmatpush1.msra.mxu0 0.0
    %296 = vmatprep.subr.mxu0 0.0
    %297 = vmatpush1.msra.mxu0 0.0
    %298 = vmatprep.subr.mxu0 0.0
    %299 = vmatpush1.msra.mxu0 0.0
    %300 = vmatprep.subr.mxu0 0.0
    %301 = vmatpush1.msra.mxu0 0.0
    %302 = vmatprep.subr.mxu0 0.0
    %303 = vmatpush1.msra.mxu0 0.0
    %304 = vmatprep.subr.mxu0 0.0
    %305 = vmatpush1.msra.mxu0 0.0
    %306 = vmatprep.subr.mxu0 0.0
    %307 = vmatpush1.msra.mxu0 0.0
    %308 = vmatprep.subr.mxu0 0.0
    %309 = vmatpush1.msra.mxu0 0.0
    %310 = vmatprep.subr.mxu0 0.0
    %311 = vmatpush1.msra.mxu0 0.0
    %312 = vmatprep.subr.mxu0 0.0
    %313 = vmatpush1.msra.mxu0 0.0
    %314 = vmatprep.subr.mxu0 0.0
    %315 = vmatpush1.msra.mxu0 0.0
    %316 = vmatprep.subr.mxu0 0.0
    %317 = vmatpush1.msra.mxu0 0.0
    %318 = vmatprep.subr.mxu0 0.0
    %319 = vmatpush1.msra.mxu0 0.0
    %320 = vmatprep.subr.mxu0 0.0
    %321 = vmatpush1.msra.mxu0 0.0
    %322 = vmatprep.subr.mxu0 0.0
    %323 = vmatpush1.msra.mxu0 0.0
    %324 = vmatprep.subr.mxu0 0.0
    %325 = vmatpush1.msra.mxu0 0.0
    %326 = vmatprep.subr.mxu0 0.0
    %327 = vmatpush1.msra.mxu0 0.0
    %328 = vmatprep.subr.mxu0 0.0
    %329 = vmatpush1.msra.mxu0 0.0
    %330 = vmatprep.subr.mxu0 0.0
    %331 = vmatpush1.msra.mxu0 0.0
    %332 = vmatprep.subr.mxu0 0.0
    %333 = vmatpush1.msra.mxu0 0.0
    %334 = vmatprep.subr.mxu0 0.0
    %335 = vmatpush1.msra.mxu0 0.0
    %336 = vmatprep.subr.mxu0 0.0
    %337 = vmatpush1.msra.mxu0 0.0
    %338 = vmatprep.subr.mxu0 0.0
    %339 = vmatpush1.msra.mxu0 0.0
    %340 = vmatprep.subr.mxu0 0.0
    %341 = vmatpush1.msra.mxu0 0.0
    %342 = vmatprep.subr.mxu0 0.0
    %343 = vmatpush1.msra.mxu0 0.0
    %344 = vmatprep.subr.mxu0 0.0
    %345 = vmatpush1.msra.mxu0 0.0
    %346 = vmatprep.mubr.f32.mxu0 0.0
    %v347 = vand.u32 %v41, 4294901760
    %v348 = vsub.f32 %v41, %v347
    %v349 = vand.u32 %v348, 4294901760
    %350 = vmatmul.mubr.f32.gmra.mrb[0].mxu0 %v349
    %v351 = vpop.f32.mrb[0].mxu0
    %v352 = vadd.f32 %v276, %v351
    %v353 = vpop.f32.mrb[0].mxu0
    %v354 = vadd.f32 %v278, %v353
    %355 = vdwg.mxu0
    %v356 = vand.u32 %v38, 4294901760
    %v357 = vsub.f32 %v38, %v356
    %v358 = vand.u32 %v357, 4294901760
    %359 = vmatprep.subr.mxu0 %v358
    %v360 = vand.u32 %v37, 4294901760
    %v361 = vsub.f32 %v37, %v360
    %v362 = vand.u32 %v361, 4294901760
    %363 = vmatpush1.msra.mxu0 %v362
    %364 = vmatprep.subr.mxu0 0.0
    %365 = vmatpush1.msra.mxu0 0.0
    %366 = vmatprep.subr.mxu0 0.0
    %367 = vmatpush1.msra.mxu0 0.0
    %368 = vmatprep.subr.mxu0 0.0
    %369 = vmatpush1.msra.mxu0 0.0
    %370 = vmatprep.subr.mxu0 0.0
    %371 = vmatpush1.msra.mxu0 0.0
    %372 = vmatprep.subr.mxu0 0.0
    %373 = vmatpush1.msra.mxu0 0.0
    %374 = vmatprep.subr.mxu0 0.0
    %375 = vmatpush1.msra.mxu0 0.0
    %376 = vmatprep.subr.mxu0 0.0
    %377 = vmatpush1.msra.mxu0 0.0
    %378 = vmatprep.subr.mxu0 0.0
    %379 = vmatpush1.msra.mxu0 0.0
    %380 = vmatprep.subr.mxu0 0.0
    %381 = vmatpush1.msra.mxu0 0.0
    %382 = vmatprep.subr.mxu0 0.0
    %383 = vmatpush1.msra.mxu0 0.0
    %384 = vmatprep.subr.mxu0 0.0
    %385 = vmatpush1.msra.mxu0 0.0
    %386 = vmatprep.subr.mxu0 0.0
    %387 = vmatpush1.msra.mxu0 0.0
    %388 = vmatprep.subr.mxu0 0.0
    %389 = vmatpush1.msra.mxu0 0.0
    %390 = vmatprep.subr.mxu0 0.0
    %391 = vmatpush1.msra.mxu0 0.0
    %392 = vmatprep.subr.mxu0 0.0
    %393 = vmatpush1.msra.mxu0 0.0
    %394 = vmatprep.subr.mxu0 0.0
    %395 = vmatpush1.msra.mxu0 0.0
    %396 = vmatprep.subr.mxu0 0.0
    %397 = vmatpush1.msra.mxu0 0.0
    %398 = vmatprep.subr.mxu0 0.0
    %399 = vmatpush1.msra.mxu0 0.0
    %400 = vmatprep.subr.mxu0 0.0
    %401 = vmatpush1.msra.mxu0 0.0
    %402 = vmatprep.subr.mxu0 0.0
    %403 = vmatpush1.msra.mxu0 0.0
    %404 = vmatprep.subr.mxu0 0.0
    %405 = vmatpush1.msra.mxu0 0.0
    %406 = vmatprep.subr.mxu0 0.0
    %407 = vmatpush1.msra.mxu0 0.0
    %408 = vmatprep.subr.mxu0 0.0
    %409 = vmatpush1.msra.mxu0 0.0
    %410 = vmatprep.subr.mxu0 0.0
    %411 = vmatpush1.msra.mxu0 0.0
    %412 = vmatprep.subr.mxu0 0.0
    %413 = vmatpush1.msra.mxu0 0.0
    %414 = vmatprep.subr.mxu0 0.0
    %415 = vmatpush1.msra.mxu0 0.0
    %416 = vmatprep.subr.mxu0 0.0
    %417 = vmatpush1.msra.mxu0 0.0
    %418 = vmatprep.subr.mxu0 0.0
    %419 = vmatpush1.msra.mxu0 0.0
    %420 = vmatprep.subr.mxu0 0.0
    %421 = vmatpush1.msra.mxu0 0.0
    %422 = vmatprep.subr.mxu0 0.0
    %423 = vmatpush1.msra.mxu0 0.0
    %424 = vmatprep.subr.mxu0 0.0
    %425 = vmatpush1.msra.mxu0 0.0
    %426 = vmatprep.mubr.f32.mxu0 0.0
    %v427 = vand.u32 %v41, 4294901760
    %428 = vmatmul.mubr.f32.gmra.mrb[0].mxu0 %v427
    %v429 = vpop.f32.mrb[0].mxu0
    %v430 = vadd.f32 %v352, %v429
    %v431 = vpop.f32.mrb[0].mxu0
    %v432 = vadd.f32 %v354, %v431
    %433 = vdwg.mxu0
    %v434 = vand.u32 %v38, 4294901760
    %435 = vmatprep.subr.mxu0 %v434
    %v436 = vand.u32 %v37, 4294901760
    %437 = vmatpush1.msra.mxu0 %v436
    %438 = vmatprep.subr.mxu0 0.0
    %439 = vmatpush1.msra.mxu0 0.0
    %440 = vmatprep.subr.mxu0 0.0
    %441 = vmatpush1.msra.mxu0 0.0
    %442 = vmatprep.subr.mxu0 0.0
    %443 = vmatpush1.msra.mxu0 0.0
    %444 = vmatprep.subr.mxu0 0.0
    %445 = vmatpush1.msra.mxu0 0.0
    %446 = vmatprep.subr.mxu0 0.0
    %447 = vmatpush1.msra.mxu0 0.0
    %448 = vmatprep.subr.mxu0 0.0
    %449 = vmatpush1.msra.mxu0 0.0
    %450 = vmatprep.subr.mxu0 0.0
    %451 = vmatpush1.msra.mxu0 0.0
    %452 = vmatprep.subr.mxu0 0.0
    %453 = vmatpush1.msra.mxu0 0.0
    %454 = vmatprep.subr.mxu0 0.0
    %455 = vmatpush1.msra.mxu0 0.0
    %456 = vmatprep.subr.mxu0 0.0
    %457 = vmatpush1.msra.mxu0 0.0
    %458 = vmatprep.subr.mxu0 0.0
    %459 = vmatpush1.msra.mxu0 0.0
    %460 = vmatprep.subr.mxu0 0.0
    %461 = vmatpush1.msra.mxu0 0.0
    %462 = vmatprep.subr.mxu0 0.0
    %463 = vmatpush1.msra.mxu0 0.0
    %464 = vmatprep.subr.mxu0 0.0
    %465 = vmatpush1.msra.mxu0 0.0
    %466 = vmatprep.subr.mxu0 0.0
    %467 = vmatpush1.msra.mxu0 0.0
    %468 = vmatprep.subr.mxu0 0.0
    %469 = vmatpush1.msra.mxu0 0.0
    %470 = vmatprep.subr.mxu0 0.0
    %471 = vmatpush1.msra.mxu0 0.0
    %472 = vmatprep.subr.mxu0 0.0
    %473 = vmatpush1.msra.mxu0 0.0
    %474 = vmatprep.subr.mxu0 0.0
    %475 = vmatpush1.msra.mxu0 0.0
    %476 = vmatprep.subr.mxu0 0.0
    %477 = vmatpush1.msra.mxu0 0.0
    %478 = vmatprep.subr.mxu0 0.0
    %479 = vmatpush1.msra.mxu0 0.0
    %480 = vmatprep.subr.mxu0 0.0
    %481 = vmatpush1.msra.mxu0 0.0
    %482 = vmatprep.subr.mxu0 0.0
    %483 = vmatpush1.msra.mxu0 0.0
    %484 = vmatprep.subr.mxu0 0.0
    %485 = vmatpush1.msra.mxu0 0.0
    %486 = vmatprep.subr.mxu0 0.0
    %487 = vmatpush1.msra.mxu0 0.0
    %488 = vmatprep.subr.mxu0 0.0
    %489 = vmatpush1.msra.mxu0 0.0
    %490 = vmatprep.subr.mxu0 0.0
    %491 = vmatpush1.msra.mxu0 0.0
    %492 = vmatprep.subr.mxu0 0.0
    %493 = vmatpush1.msra.mxu0 0.0
    %494 = vmatprep.subr.mxu0 0.0
    %495 = vmatpush1.msra.mxu0 0.0
    %496 = vmatprep.subr.mxu0 0.0
    %497 = vmatpush1.msra.mxu0 0.0
    %498 = vmatprep.subr.mxu0 0.0
    %499 = vmatpush1.msra.mxu0 0.0
    %500 = vmatprep.mubr.f32.mxu0 0.0
    %v501 = vand.u32 %v41, 4294901760
    %502 = vmatmul.mubr.f32.gmra.mrb[0].mxu0 %v501
    %v503 = vpop.f32.mrb[0].mxu0
    %v504 = vadd.f32 %v430, %v503
    %v505 = vpop.f32.mrb[0].mxu0
    %v506 = vadd.f32 %v432, %v505
    %507 = vdwg.mxu0
    %508 = vst [vmem:[#allocation7] sm:$0xff] %v504
    %509 = vst [vmem:[#allocation7 + $0x8] sm:$0xff] %v506
    // Predicated region
    $region18: #{tpu_custom_call.1} parent=1 // pred_check
      _
    $region19: #{tpu_custom_call.1} parent=1 // pred_check_branch
      %511 = sbr.rel (0) target = $region21
    $region20: #{tpu_custom_call.1} parent=1 // pred_region
      %s513 = ssub.s32 256, 256
      %514 = vsyncadd [#allocation4], %s513
      %s516 = sshll.u32 [#allocation7], 4
      %s517 = int_to_ptr.vmem [resolvable:$true] %s516
      %519 = dma.vmem_to_hbm [thread:$0]  %s517, 256, %s2, [#allocation4]
    $region21: #{tpu_custom_call.1} parent=1 // pred_fallthru
      _
    // Predicated region
    $region22: #{tpu_custom_call.1} parent=1 // pred_check
      _
    $region23: #{tpu_custom_call.1} parent=1 // pred_check_branch
      %521 = sbr.rel (0) target = $region25
    $region24: #{tpu_custom_call.1} parent=1 // pred_region
      %522 = dma.done [#allocation4], 256
    $region25: #{tpu_custom_call.1} parent=1 // pred_fallthru
      _
    %523 = vsyncpa [#allocation3], 1
    %524 = vsyncpa [#allocation6], 1
    %525 = vsyncpa [#allocation4], 1

</llo_original>
